<compile_context>
chip_gen: v7x
topology: tpu7x:2x2x1
jax: 0.10.0
libtpu: 0.0.40
codegen_flags: <defaults>
</compile_context>

<pallas_src>
import jax
import jax.numpy as jnp
from jax.experimental import pallas as pl
from jax.experimental.pallas import tpu as pltpu  # noqa: F401 (kept for TPU memory-space use if scaled up)

DROP_P = 0.4
KEEP_P = 1.0 - DROP_P
# Drop iff signed-int32 random bits < this threshold:
# P(bits_i32 < -2^31 + round(p * 2^32)) == p exactly (up to 2^-32).
_SIGNED_DROP_THRESHOLD = int(round(DROP_P * 2**32)) - 2**31  # = -429496730


def _dropout_kernel(bits_ref, x_ref, o_ref):
    # keep with probability 1 - p, scale survivors by 1 / (1 - p)
    keep = bits_ref[...] >= jnp.int32(_SIGNED_DROP_THRESHOLD)
    scale = jnp.float32(1.0 / KEEP_P)
    o_ref[...] = jnp.where(keep, x_ref[...] * scale, jnp.float32(0.0))


def dropout_pallas(x_nchw, key):
    """Standalone inverted-dropout (p=0.4) on TPU via Pallas."""
    n, c, h, w = x_nchw.shape
    total = n * c * h * w
    assert total % 128 == 0, "flattened size must be lane-aligned for this demo"
    rows = total // 128
    x2d = x_nchw.reshape(rows, 128).astype(jnp.float32)

    # Random bits generated once outside the kernel (works on TPU and in
    # interpret mode); bitcast to int32 so the in-kernel compare is signed.
    bits_u32 = jax.random.bits(key, (rows, 128), dtype=jnp.uint32)
    bits_i32 = jax.lax.bitcast_convert_type(bits_u32, jnp.int32)

    out2d = pl.pallas_call(
        _dropout_kernel,
        out_shape=jax.ShapeDtypeStruct(x2d.shape, jnp.float32),
        in_specs=[
            pl.BlockSpec(x2d.shape, lambda: (0, 0)),  # random bits slab
            pl.BlockSpec(x2d.shape, lambda: (0, 0)),  # x slab (aliased to out)
        ],
        out_specs=pl.BlockSpec(x2d.shape, lambda: (0, 0)),
        input_output_aliases={1: 0},  # write dropout in place over x2d
    )(bits_i32, x2d)

    return out2d.reshape(n, c, h, w)


def model_forward(x_nchw):
    """Mirror of the PyTorch module's forward.

    t1 = dropout(x) is dead code in the original module (the result is
    discarded and the function returns the Python int 1), so per the
    performance review we do not launch the kernel here at all.
    """
    del x_nchw
    return 1


if __name__ == "__main__":
    key = jax.random.PRNGKey(0)
    xkey, dkey = jax.random.split(key)
    x = jax.random.normal(xkey, (2, 4, 16, 16), dtype=jnp.float32)

    # Exercise the Pallas dropout kernel once and sanity-check its output.
    t1 = dropout_pallas(x, dkey)
    jax.block_until_ready(t1)
    assert t1.shape == x.shape and t1.dtype == jnp.float32

    # Survivors must equal x / (1 - p); zeros are the dropped entries.
    nz = t1 != 0.0
    assert bool(jnp.all(jnp.where(nz, jnp.abs(t1 - x / KEEP_P) < 1e-5, True)))
    # Loose statistical check on the drop fraction (p = 0.4, 2048 elements).
    drop_frac = float(jnp.mean((t1 == 0.0).astype(jnp.float32)))
    assert 0.2 < drop_frac < 0.6, f"unexpected drop fraction {drop_frac}"

    # Module semantics: forward returns the Python int 1 (no kernel launch).
    result = model_forward(x)
    assert result == 1

    print("KERNEL_OK")
</pallas_src>

<mosaic_0001>
module attributes {stable_mosaic.version = 11 : i64} {
  func.func @_dropout_kernel(%arg0: memref<16x128xi32, #tpu.memory_space<vmem>>, %arg1: memref<16x128xf32, #tpu.memory_space<vmem>>, %arg2: memref<16x128xf32, #tpu.memory_space<vmem>>) attributes {dimension_semantics = [], scalar_prefetch = 0 : i64, scratch_operands = 0 : i64, tpu.core_type = #tpu.core_type<tc>} {
    %c0 = arith.constant 0 : index
    %c0_0 = arith.constant 0 : index
    %0 = vector.load %arg0[%c0, %c0_0] : memref<16x128xi32, #tpu.memory_space<vmem>>, vector<16x128xi32>
    %c-429496730_i32 = arith.constant -429496730 : i32
    %1 = vector.broadcast %c-429496730_i32 : i32 to vector<16x128xi32>
    %2 = arith.cmpi sge, %0, %1 : vector<16x128xi32>
    %c0_1 = arith.constant 0 : index
    %c0_2 = arith.constant 0 : index
    %3 = vector.load %arg1[%c0_1, %c0_2] : memref<16x128xf32, #tpu.memory_space<vmem>>, vector<16x128xf32>
    %cst = arith.constant 1.66666663 : f32
    %4 = vector.broadcast %cst : f32 to vector<16x128xf32>
    %5 = arith.mulf %3, %4 : vector<16x128xf32>
    %cst_3 = arith.constant 0.000000e+00 : f32
    %6 = vector.broadcast %cst_3 : f32 to vector<16x128xf32>
    %7 = arith.select %2, %5, %6 : vector<16x128xi1>, vector<16x128xf32>
    %c0_4 = arith.constant 0 : index
    %c0_5 = arith.constant 0 : index
    %8 = vector.load %arg2[%c0_4, %c0_5] : memref<16x128xf32, #tpu.memory_space<vmem>>, vector<16x128xf32>
    tpu.vector_store %arg2[%c0_4, %c0_5], %7 {strides = array<i32>} : memref<16x128xf32, #tpu.memory_space<vmem>>, vector<16x128xf32>,
    return
  }
}

</mosaic_0001>

<llo_original>
// kernel: tpu_custom_call.1
$region0: #{tpu_custom_call.1}
  #allocation0 [shape = 'u32[]', space=smem, size = 0x4, offset = 0x4, fixed_abs, tag = 'smem constant byte address 0x4 - core index']
  #allocation1 [shape = 'u32[144,128]{1,0:T(1,128)}', space=vmem, size = 0x12000, scoped, tag = 'internal scratch']
  %s0 = inlined_call_operand.vmem [shape: s32[16,128], index: 0, kind: input, shape index: {}]
  %s1 = inlined_call_operand.hbm [shape: f32[16,128], index: 1, kind: input, shape index: {}, may-alias: {1,2}]
  %s2 = inlined_call_operand.hbm [shape: f32[16,128], index: 2, kind: output, shape index: {}, may-alias: {1,2}]
  %s3 = sld [smem:[#allocation0]]
  $region22: #{tpu_custom_call.1} parent=0
    _
  %s5 = ssub.s32 1, %s3
  %s6 = scalar_select 0, %s5, %s3
  $region1: #{tpu_custom_call.1} parent=0
    #allocation2 [shape = 'u8[8192]{0}', space=vmem, size = 0x2000, scoped, tag = 'input window, operand 1, single buffered']
    #allocation3 [shape = 's32[1]{0}', space=sflag, size = 0x4, scoped, tag = 'scoped memory for tpu_custom_call.1']
    #allocation4 [shape = 's32[1]{0}', space=sflag, size = 0x4, scoped, tag = 'scoped memory for tpu_custom_call.1']
    #allocation5 [shape = 'u8[8192]{0}', space=vmem, size = 0x2000, scoped, tag = 'output window, operand 0, single buffered']
    %7 = vsyncpa [#allocation3], 0
    %8 = vsyncpa [#allocation4], 0
    // Predicated region
    $region2: #{tpu_custom_call.1} parent=1 // pred_check
      _
    $region3: #{tpu_custom_call.1} parent=1 // pred_check_branch
      %10 = sbr.rel (0) target = $region5
    $region4: #{tpu_custom_call.1} parent=1 // pred_region
      _
    $region5: #{tpu_custom_call.1} parent=1 // pred_fallthru
      _
    // Predicated region
    $region6: #{tpu_custom_call.1} parent=1 // pred_check
      _
    $region7: #{tpu_custom_call.1} parent=1 // pred_check_branch
      %12 = sbr.rel (0) target = $region9
    $region8: #{tpu_custom_call.1} parent=1 // pred_region
      %s14 = ssub.s32 256, 256
      %15 = vsyncadd [#allocation3], %s14
      %s16 = sshll.u32 [#allocation2], 4
      %s17 = int_to_ptr.vmem [resolvable:$true] %s16
      %22 = dma.hbm_to_vmem [thread:$0]  %s1, 256, %s17, [#allocation3], 128, 128, 8
    $region9: #{tpu_custom_call.1} parent=1 // pred_fallthru
      _
    // Predicated region
    $region10: #{tpu_custom_call.1} parent=1 // pred_check
      _
    $region11: #{tpu_custom_call.1} parent=1 // pred_check_branch
      %24 = sbr.rel (0) target = $region13
    $region12: #{tpu_custom_call.1} parent=1 // pred_region
      %25 = dma.done [#allocation3], 256
    $region13: #{tpu_custom_call.1} parent=1 // pred_fallthru
      _
    %v26 = vld [vmem:[%s0] sm:$0xff]
    %v27 = vld [vmem:[%s0 + $0x8] sm:$0xff]
    %vm28 = vcmp.ge.s32.totalorder %v26, 3865470566
    %vm29 = vcmp.ge.s32.totalorder %v27, 3865470566
    %v30 = vld [vmem:[#allocation2] sm:$0xff]
    %v31 = vld [vmem:[#allocation2 + $0x8] sm:$0xff]
    %v32 = vmul.f32 %v30, 1.6666666
    %v33 = vmul.f32 %v31, 1.6666666
    %v34 = vsel %vm28, %v32, 0.0
    %v35 = vsel %vm29, %v33, 0.0
    %36 = vst [vmem:[#allocation5] sm:$0xff] %v34
    %37 = vst [vmem:[#allocation5 + $0x8] sm:$0xff] %v35
    // Predicated region
    $region14: #{tpu_custom_call.1} parent=1 // pred_check
      _
    $region15: #{tpu_custom_call.1} parent=1 // pred_check_branch
      %39 = sbr.rel (0) target = $region17
    $region16: #{tpu_custom_call.1} parent=1 // pred_region
      %s41 = ssub.s32 256, 256
      %42 = vsyncadd [#allocation4], %s41
      %s43 = sshll.u32 [#allocation5], 4
      %s44 = int_to_ptr.vmem [resolvable:$true] %s43
      %49 = dma.vmem_to_hbm [thread:$0]  %s44, 256, %s2, [#allocation4], 128, 128, 8
    $region17: #{tpu_custom_call.1} parent=1 // pred_fallthru
      _
    // Predicated region
    $region18: #{tpu_custom_call.1} parent=1 // pred_check
      _
    $region19: #{tpu_custom_call.1} parent=1 // pred_check_branch
      %51 = sbr.rel (0) target = $region21
    $region20: #{tpu_custom_call.1} parent=1 // pred_region
      %52 = dma.done [#allocation4], 256
    $region21: #{tpu_custom_call.1} parent=1 // pred_fallthru
      _
    %53 = vsyncpa [#allocation3], 1
    %54 = vsyncpa [#allocation4], 1

</llo_original>
